<compile_context>
chip_gen: v7x
topology: tpu7x:2x2x1
jax: 0.10.0
libtpu: 0.0.40
codegen_flags: <defaults>
</compile_context>

<pallas_src>
import functools
from typing import NamedTuple

import jax
import jax.numpy as jnp
from jax.experimental import pallas as pl
from jax.experimental.pallas import tpu as pltpu

LOGSTD_MAX = 2.0
LOGSTD_MIN = -10.0

_LANE = 128     # lane width
_SUBLANE = 8    # f32 sublane width


def _round_up(x: int, m: int) -> int:
    return ((x + m - 1) // m) * m


def _supports_single_buffer() -> bool:
    if not hasattr(pl, "Buffered"):
        return False
    try:
        pl.BlockSpec((_SUBLANE, _LANE), lambda i: (0, 0), pipeline_mode=pl.Buffered(1))
        return True
    except TypeError:
        return False


_SINGLE_BUFFER_WEIGHTS = _supports_single_buffer()


def _resident_spec(shape):
    """BlockSpec for a VMEM-resident (constant index_map) operand, single-buffered."""
    index_map = lambda i: (0, 0)
    if _SINGLE_BUFFER_WEIGHTS:
        return pl.BlockSpec(shape, index_map, pipeline_mode=pl.Buffered(1))
    return pl.BlockSpec(shape, index_map)


def _vmem_capacity_bytes() -> int:
    try:
        info = pltpu.get_tpu_info()
        cap = getattr(info, "vmem_capacity_bytes", None)
        if cap:
            return int(cap)
    except Exception:
        pass
    return 64 << 20  # conservative default: v7x per-TensorCore VMEM


class PreparedParams(NamedTuple):
    w1: jax.Array      # [obs_dim, hidden_p]   compute dtype
    b1: jax.Array      # [1, hidden_p]         f32
    w2: jax.Array      # [hidden_p, 2*half_p]  compute dtype (mean head | log_std head)
    b2: jax.Array      # [1, 2*half_p]         f32
    obs_dim: int
    hidden_p: int
    half: int
    half_p: int
    segment_len: int
    action_dim: int


def prepare_params(params, segment_len, action_dim, *, compute_dtype=jnp.float32):
    """Pads / fuses the weights ONCE; reuse the result across forward calls."""
    w1, b1, w2, b2 = params
    obs_dim, hidden_dim = w1.shape
    half = segment_len * action_dim
    assert w2.shape == (hidden_dim, 2 * half)
    hidden_p = _round_up(hidden_dim, _LANE)
    half_p = _round_up(half, _LANE)
    f32 = jnp.float32

    def pad2(a, rows, cols, dtype):
        out = jnp.zeros((rows, cols), dtype)
        return out.at[: a.shape[0], : a.shape[1]].set(a.astype(dtype))

    b1 = b1.reshape(1, -1)
    b2 = b2.reshape(1, -1)

    # W1: keep the K (obs_dim) axis unpadded; pad only the hidden (lane) axis.
    w1_p = pad2(w1, obs_dim, hidden_p, compute_dtype)
    b1_p = pad2(b1, 1, hidden_p, f32)

    # Fused output projection: pad each head to half_p BEFORE concatenating so
    # the in-kernel split at half_p is lane-aligned; one N = 2*half_p matmul.
    w2_p = jnp.concatenate(
        [pad2(w2[:, :half], hidden_p, half_p, compute_dtype),
         pad2(w2[:, half:], hidden_p, half_p, compute_dtype)], axis=1)
    b2_p = jnp.concatenate(
        [pad2(b2[:, :half], 1, half_p, f32),
         pad2(b2[:, half:], 1, half_p, f32)], axis=1)

    return PreparedParams(w1_p, b1_p, w2_p, b2_p,
                          obs_dim, hidden_p, half, half_p, segment_len, action_dim)


def _action_seq_kernel(x_ref, w1_ref, b1_ref, w2_ref, b2_ref, mean_ref, std_ref,
                       *, half, half_p):
    """Fused MLP + (tanh mean head, exp-clip std head) for one batch tile.

    x_ref:    [TB, obs_dim]
    w1_ref:   [obs_dim, hid_p]      b1_ref: [1, hid_p]
    w2_ref:   [hid_p, 2*half_p]     b2_ref: [1, 2*half_p]
    mean_ref: [TB, half]            std_ref: [TB, half]
    """
    # Hidden layer: MXU matmul with f32 accumulation, ReLU on the VPU.
    x = x_ref[...].astype(w1_ref.dtype)
    h = jnp.dot(x, w1_ref[...], preferred_element_type=jnp.float32) + b1_ref[...]
    h = jnp.maximum(h, 0.0).astype(w2_ref.dtype)

    # Fused output projection: one N = 2*half_p matmul (mean head | log_std head).
    # TODO(synk): for hidden_p >= 1024 with TB >= 512, split the hidden axis with
    # an inner lax.fori_loop(unroll=True) if the bundle dump shows h spills.
    net = jnp.dot(h, w2_ref[...], preferred_element_type=jnp.float32) + b2_ref[...]

    # Lane-aligned split at half_p; only the true `half` columns are stored.
    mean_ref[...] = jnp.tanh(net[:, :half]).astype(mean_ref.dtype)
    log_std = net[:, half_p:half_p + half]
    std_ref[...] = jnp.exp(jnp.clip(log_std, LOGSTD_MIN, LOGSTD_MAX)).astype(std_ref.dtype)


def action_sequence_forward(obs, prepared: PreparedParams, *, tile_b=512,
                            out_dtype=jnp.float32):
    """Runs the kernel; returns (mean, std), each [B, segment_len, action_dim]."""
    assert obs.ndim == 2 and obs.shape[1] == prepared.obs_dim
    batch = obs.shape[0]
    obs_dim, hidden_p = prepared.obs_dim, prepared.hidden_p
    half, half_p = prepared.half, prepared.half_p

    # Batch tile: multiple of the sublane tile of the narrowest STREAMED dtype
    # (f32 -> 8, bf16 -> 16); no wrapper-side batch padding (Pallas masks the
    # final partial block).
    min_itemsize = min(jnp.dtype(out_dtype).itemsize, jnp.dtype(obs.dtype).itemsize)
    sublane = max(_SUBLANE, 32 // min_itemsize)
    tb = _round_up(min(tile_b, batch), sublane)
    grid = (pl.cdiv(batch, tb),)

    # Per-TensorCore VMEM budget: resident weights (single-buffered) +
    # double-buffered streamed tiles + f32 intermediates + margin.
    wdt = jnp.dtype(prepared.w1.dtype).itemsize
    odt = jnp.dtype(out_dtype).itemsize
    weight_bytes = (obs_dim * hidden_p + hidden_p * 2 * half_p) * wdt \
        + (hidden_p + 2 * half_p) * 4
    if not _SINGLE_BUFFER_WEIGHTS:
        weight_bytes *= 2
    stream_bytes = tb * obs_dim * obs.dtype.itemsize + 2 * tb * half * odt
    interm_bytes = tb * (hidden_p + 2 * half_p) * 4
    need = weight_bytes + 2 * stream_bytes + interm_bytes + (4 << 20)

    cap = int(_vmem_capacity_bytes() * 0.85)   # ~54 MiB on v7x, ~108 MiB on v5e/v6e
    vmem_limit = int(min(max(need, 16 << 20), cap))
    if weight_bytes + (2 << 20) > vmem_limit:
        raise ValueError(
            f"Resident weights ({weight_bytes >> 20} MiB) exceed the per-core VMEM "
            f"budget ({vmem_limit >> 20} MiB); reduce hidden_dim/segment_len or use "
            f"compute_dtype=jnp.bfloat16 in prepare_params.")

    batch_map = lambda i: (i, 0)
    kernel = functools.partial(_action_seq_kernel, half=half, half_p=half_p)

    mean2d, std2d = pl.pallas_call(
        kernel,
        out_shape=(jax.ShapeDtypeStruct((batch, half), out_dtype),
                   jax.ShapeDtypeStruct((batch, half), out_dtype)),
        grid=grid,
        in_specs=[
            pl.BlockSpec((tb, obs_dim), batch_map),     # obs (streamed, unpadded)
            _resident_spec((obs_dim, hidden_p)),        # W1 (VMEM resident)
            _resident_spec((1, hidden_p)),              # b1
            _resident_spec((hidden_p, 2 * half_p)),     # fused W2 (mean | log_std)
            _resident_spec((1, 2 * half_p)),            # fused b2
        ],
        out_specs=(
            pl.BlockSpec((tb, half), batch_map),
            pl.BlockSpec((tb, half), batch_map),
        ),
        compiler_params=pltpu.CompilerParams(
            dimension_semantics=("parallel",),
            vmem_limit_bytes=vmem_limit,
        ),
    )(obs, prepared.w1, prepared.b1, prepared.w2, prepared.b2)

    mean = mean2d.reshape(batch, prepared.segment_len, prepared.action_dim)
    std = std2d.reshape(batch, prepared.segment_len, prepared.action_dim)
    return mean, std


def init_params(key, obs_dim, hidden_dim, segment_len, action_dim):
    """Deterministic parameter init (uniform fan-in scaling, like nn.Linear)."""
    out_dim = 2 * segment_len * action_dim
    k1, k2, k3, k4 = jax.random.split(key, 4)
    lim1 = 1.0 / jnp.sqrt(obs_dim)
    lim2 = 1.0 / jnp.sqrt(hidden_dim)
    w1 = jax.random.uniform(k1, (obs_dim, hidden_dim), jnp.float32, -lim1, lim1)
    b1 = jax.random.uniform(k2, (1, hidden_dim), jnp.float32, -lim1, lim1)
    w2 = jax.random.uniform(k3, (hidden_dim, out_dim), jnp.float32, -lim2, lim2)
    b2 = jax.random.uniform(k4, (1, out_dim), jnp.float32, -lim2, lim2)
    return (w1, b1, w2, b2)


def _reference_forward(obs, params, segment_len, action_dim):
    """Pure-JAX reference for correctness check."""
    w1, b1, w2, b2 = params
    h = jnp.maximum(obs @ w1 + b1, 0.0)
    net_out = h @ w2 + b2
    half = segment_len * action_dim
    mean = jnp.tanh(net_out[:, :half]).reshape(obs.shape[0], segment_len, action_dim)
    std = jnp.exp(jnp.clip(net_out[:, half:], LOGSTD_MIN, LOGSTD_MAX)).reshape(
        obs.shape[0], segment_len, action_dim)
    return mean, std


if __name__ == "__main__":
    # Small shapes consistent with the module's forward.
    batch_size = 4
    obs_dim = 16
    action_dim = 4
    segment_len = 8
    hidden_dim = 32

    key = jax.random.PRNGKey(0)
    k_obs, k_params, k_obs2 = jax.random.split(key, 3)

    obs = jax.random.normal(k_obs, (batch_size, obs_dim), dtype=jnp.float32)
    params = init_params(k_params, obs_dim, hidden_dim, segment_len, action_dim)
    ref_mean, ref_std = _reference_forward(obs, params, segment_len, action_dim)

    # f32 path (exact). Weights are padded / fused once and reused across calls.
    prepared = prepare_params(params, segment_len, action_dim)
    mean, std = action_sequence_forward(obs, prepared)
    mean = jax.block_until_ready(mean)
    std = jax.block_until_ready(std)
    assert mean.shape == (batch_size, segment_len, action_dim)
    assert std.shape == (batch_size, segment_len, action_dim)
    assert jnp.allclose(mean, ref_mean, atol=1e-5, rtol=1e-5)
    assert jnp.allclose(std, ref_std, atol=1e-5, rtol=1e-5)

    # Multi-tile grid with a partial final block (batch=20, tile=8 -> 3 steps).
    obs2 = jax.random.normal(k_obs2, (20, obs_dim), dtype=jnp.float32)
    mean2, std2 = action_sequence_forward(obs2, prepared, tile_b=8)
    mean2 = jax.block_until_ready(mean2)
    ref_mean2, ref_std2 = _reference_forward(obs2, params, segment_len, action_dim)
    assert jnp.allclose(mean2, ref_mean2, atol=1e-5, rtol=1e-5)
    assert jnp.allclose(std2, ref_std2, atol=1e-5, rtol=1e-5)

    # bf16 compute + bf16 outputs (halves weight and output HBM traffic); looser tol.
    prepared_bf16 = prepare_params(params, segment_len, action_dim,
                                   compute_dtype=jnp.bfloat16)
    mean_bf, std_bf = action_sequence_forward(obs, prepared_bf16,
                                              out_dtype=jnp.bfloat16)
    mean_bf = jax.block_until_ready(mean_bf)
    assert jnp.allclose(mean_bf.astype(jnp.float32), ref_mean, atol=5e-2, rtol=5e-2)
    assert jnp.allclose(std_bf.astype(jnp.float32), ref_std, atol=5e-2, rtol=5e-2)

    print("KERNEL_OK")
</pallas_src>

<mosaic_0001>
module attributes {stable_mosaic.version = 11 : i64} {
  func.func @_action_seq_kernel(%arg0: i32, %arg1: memref<8x16xf32, #tpu.memory_space<vmem>>, %arg2: memref<16x128xf32, #tpu.memory_space<vmem>>, %arg3: memref<1x128xf32, #tpu.memory_space<vmem>>, %arg4: memref<128x256xf32, #tpu.memory_space<vmem>>, %arg5: memref<1x256xf32, #tpu.memory_space<vmem>>, %arg6: memref<8x32xf32, #tpu.memory_space<vmem>>, %arg7: memref<8x32xf32, #tpu.memory_space<vmem>>) attributes {dimension_semantics = [#tpu.dimension_semantics<parallel>], iteration_bounds = array<i64: 1>, scalar_prefetch = 0 : i64, scratch_operands = 0 : i64, tpu.core_type = #tpu.core_type<tc>, window_params = [{transform_indices = @transform_0, window_bounds = array<i64: 8, 16>}, {pipeline_mode = #tpu.pipeline_mode<synchronous>, transform_indices = @transform_1, window_bounds = array<i64: 16, 128>}, {pipeline_mode = #tpu.pipeline_mode<synchronous>, transform_indices = @transform_2, window_bounds = array<i64: 1, 128>}, {pipeline_mode = #tpu.pipeline_mode<synchronous>, transform_indices = @transform_3, window_bounds = array<i64: 128, 256>}, {pipeline_mode = #tpu.pipeline_mode<synchronous>, transform_indices = @transform_4, window_bounds = array<i64: 1, 256>}, {transform_indices = @transform_5, window_bounds = array<i64: 8, 32>}, {transform_indices = @transform_6, window_bounds = array<i64: 8, 32>}]} {
    %c0 = arith.constant 0 : index
    %c0_0 = arith.constant 0 : index
    %0 = vector.load %arg1[%c0, %c0_0] : memref<8x16xf32, #tpu.memory_space<vmem>>, vector<8x16xf32>
    %c0_1 = arith.constant 0 : index
    %c0_2 = arith.constant 0 : index
    %1 = vector.load %arg2[%c0_1, %c0_2] : memref<16x128xf32, #tpu.memory_space<vmem>>, vector<16x128xf32>
    %cst = arith.constant dense<0.000000e+00> : vector<8x128xf32>
    %2 = tpu.matmul %0, %1, %cst {dimension_numbers = #tpu.dot_dimension_numbers<[1], [0], [0], [1], [0, 0, 1, 1], [], []>} : vector<8x16xf32>, vector<16x128xf32>, vector<8x128xf32> -> vector<8x128xf32>
    %c0_3 = arith.constant 0 : index
    %c0_4 = arith.constant 0 : index
    %3 = vector.load %arg3[%c0_3, %c0_4] : memref<1x128xf32, #tpu.memory_space<vmem>>, vector<1x128xf32>
    %4 = vector.broadcast %3 : vector<1x128xf32> to vector<8x128xf32>
    %5 = arith.addf %2, %4 : vector<8x128xf32>
    %cst_5 = arith.constant 0.000000e+00 : f32
    %6 = vector.broadcast %cst_5 : f32 to vector<8x128xf32>
    %7 = arith.maximumf %5, %6 : vector<8x128xf32>
    %c0_6 = arith.constant 0 : index
    %c0_7 = arith.constant 0 : index
    %8 = vector.load %arg4[%c0_6, %c0_7] : memref<128x256xf32, #tpu.memory_space<vmem>>, vector<128x256xf32>
    %cst_8 = arith.constant dense<0.000000e+00> : vector<8x256xf32>
    %9 = tpu.matmul %7, %8, %cst_8 {dimension_numbers = #tpu.dot_dimension_numbers<[1], [0], [0], [1], [0, 0, 1, 1], [], []>} : vector<8x128xf32>, vector<128x256xf32>, vector<8x256xf32> -> vector<8x256xf32>
    %c0_9 = arith.constant 0 : index
    %c0_10 = arith.constant 0 : index
    %10 = vector.load %arg5[%c0_9, %c0_10] : memref<1x256xf32, #tpu.memory_space<vmem>>, vector<1x256xf32>
    %11 = vector.broadcast %10 : vector<1x256xf32> to vector<8x256xf32>
    %12 = arith.addf %9, %11 : vector<8x256xf32>
    %13 = vector.extract_strided_slice %12 {offsets = [0, 0], sizes = [8, 32], strides = [1, 1]} : vector<8x256xf32> to vector<8x32xf32>
    %14 = math.tanh %13 : vector<8x32xf32>
    %c0_11 = arith.constant 0 : index
    %c0_12 = arith.constant 0 : index
    %15 = vector.load %arg6[%c0_11, %c0_12] : memref<8x32xf32, #tpu.memory_space<vmem>>, vector<8x32xf32>
    tpu.vector_store %arg6[%c0_11, %c0_12], %14 {strides = array<i32>} : memref<8x32xf32, #tpu.memory_space<vmem>>, vector<8x32xf32>,
    %16 = vector.extract_strided_slice %12 {offsets = [0, 128], sizes = [8, 32], strides = [1, 1]} : vector<8x256xf32> to vector<8x32xf32>
    %cst_13 = arith.constant -1.000000e+01 : f32
    %cst_14 = arith.constant 2.000000e+00 : f32
    %17 = vector.broadcast %cst_13 : f32 to vector<8x32xf32>
    %18 = arith.maximumf %17, %16 : vector<8x32xf32>
    %19 = vector.broadcast %cst_14 : f32 to vector<8x32xf32>
    %20 = arith.minimumf %19, %18 : vector<8x32xf32>
    %21 = math.exp %20 : vector<8x32xf32>
    %c0_15 = arith.constant 0 : index
    %c0_16 = arith.constant 0 : index
    %22 = vector.load %arg7[%c0_15, %c0_16] : memref<8x32xf32, #tpu.memory_space<vmem>>, vector<8x32xf32>
    tpu.vector_store %arg7[%c0_15, %c0_16], %21 {strides = array<i32>} : memref<8x32xf32, #tpu.memory_space<vmem>>, vector<8x32xf32>,
    return
  }
  func.func @transform_0(%arg0: i32) -> (i32, i32) {
    %c0_i32 = arith.constant 0 : i32
    %c0_i32_0 = arith.constant 0 : i32
    return %arg0, %c0_i32 : i32, i32
  }
  func.func @transform_1(%arg0: i32) -> (i32, i32) {
    %c0_i32 = arith.constant 0 : i32
    %c0_i32_0 = arith.constant 0 : i32
    %c0_i32_1 = arith.constant 0 : i32
    return %c0_i32, %c0_i32_0 : i32, i32
  }
  func.func @transform_2(%arg0: i32) -> (i32, i32) {
    %c0_i32 = arith.constant 0 : i32
    %c0_i32_0 = arith.constant 0 : i32
    %c0_i32_1 = arith.constant 0 : i32
    return %c0_i32, %c0_i32_0 : i32, i32
  }
  func.func @transform_3(%arg0: i32) -> (i32, i32) {
    %c0_i32 = arith.constant 0 : i32
    %c0_i32_0 = arith.constant 0 : i32
    %c0_i32_1 = arith.constant 0 : i32
    return %c0_i32, %c0_i32_0 : i32, i32
  }
  func.func @transform_4(%arg0: i32) -> (i32, i32) {
    %c0_i32 = arith.constant 0 : i32
    %c0_i32_0 = arith.constant 0 : i32
    %c0_i32_1 = arith.constant 0 : i32
    return %c0_i32, %c0_i32_0 : i32, i32
  }
  func.func @transform_5(%arg0: i32) -> (i32, i32) {
    %c0_i32 = arith.constant 0 : i32
    %c0_i32_0 = arith.constant 0 : i32
    return %arg0, %c0_i32 : i32, i32
  }
  func.func @transform_6(%arg0: i32) -> (i32, i32) {
    %c0_i32 = arith.constant 0 : i32
    %c0_i32_0 = arith.constant 0 : i32
    return %arg0, %c0_i32 : i32, i32
  }
}

</mosaic_0001>

<llo_original>
// kernel: tpu_custom_call.1
$region0: #{tpu_custom_call.1}
  #allocation0 [shape = 'u32[]', space=smem, size = 0x4, offset = 0x4, fixed_abs, tag = 'smem constant byte address 0x4 - core index']
  #allocation1 [shape = 'u32[144,128]{1,0:T(1,128)}', space=vmem, size = 0x12000, scoped, tag = 'internal scratch']
  %s0 = inlined_call_operand.hbm [shape: f32[4,16], index: 0, kind: input, shape index: {}]
  %s1 = inlined_call_operand.hbm [shape: f32[16,128], index: 1, kind: input, shape index: {}]
  %s2 = inlined_call_operand.vmem [shape: f32[1,128], index: 2, kind: input, shape index: {}]
  %s3 = inlined_call_operand.hbm [shape: f32[128,256], index: 3, kind: input, shape index: {}]
  %s4 = inlined_call_operand.vmem [shape: f32[1,256], index: 4, kind: input, shape index: {}]
  %s5 = inlined_call_operand.hbm [shape: f32[4,32], index: 5, kind: output, shape index: {0}]
  %s6 = inlined_call_operand.hbm [shape: f32[4,32], index: 6, kind: output, shape index: {1}]
  %7 = xla_tuple %s5, %s6
  %s8 = sld [smem:[#allocation0]]
  $region50: #{tpu_custom_call.1} parent=0
    _
  %s10 = ssub.s32 1, %s8
  %s11 = scalar_select 0, %s10, %s8
  $region1: #{tpu_custom_call.1} parent=0
    #allocation2 [shape = 'u8[4096]{0}', space=vmem, size = 0x1000, scoped, tag = 'input window, operand 0, single buffered']
    #allocation3 [shape = 's32[1]{0}', space=sflag, size = 0x4, scoped, tag = 'scoped memory for tpu_custom_call.1']
    #allocation4 [shape = 's32[1]{0}', space=sflag, size = 0x4, scoped, tag = 'scoped memory for tpu_custom_call.1']
    #allocation5 [shape = 'u8[8192]{0}', space=vmem, size = 0x2000, scoped, tag = 'input window, operand 1, single buffered']
    #allocation6 [shape = 's32[1]{0}', space=sflag, size = 0x4, scoped, tag = 'scoped memory for tpu_custom_call.1']
    #allocation7 [shape = 'u8[131072]{0}', space=vmem, size = 0x20000, scoped, tag = 'input window, operand 3, single buffered']
    #allocation8 [shape = 'u8[4096]{0}', space=vmem, size = 0x1000, scoped, tag = 'output window, operand 0, single buffered']
    #allocation9 [shape = 'u8[4096]{0}', space=vmem, size = 0x1000, scoped, tag = 'output window, operand 1, single buffered']
    #allocation10 [shape = 's32[1]{0}', space=sflag, size = 0x4, scoped, tag = 'scoped memory for tpu_custom_call.1']
    %12 = vsyncpa [#allocation3], 0
    %13 = vsyncpa [#allocation6], 0
    %14 = vsyncpa [#allocation4], 0
    %15 = vsyncpa [#allocation10], 0
    // Predicated region
    $region2: #{tpu_custom_call.1} parent=1 // pred_check
      _
    $region3: #{tpu_custom_call.1} parent=1 // pred_check_branch
      %17 = sbr.rel (0) target = $region5
    $region4: #{tpu_custom_call.1} parent=1 // pred_region
      %s19 = ssub.s32 128, 64
      %20 = vsyncadd [#allocation3], %s19
      %s21 = sshll.u32 [#allocation2], 4
      %s22 = int_to_ptr.vmem [resolvable:$true] %s21
      %27 = dma.hbm_to_vmem [thread:$0]  %s0, 64, %s22, [#allocation3], 64, 64, 4
    $region5: #{tpu_custom_call.1} parent=1 // pred_fallthru
      _
    // Predicated region
    $region6: #{tpu_custom_call.1} parent=1 // pred_check
      _
    $region7: #{tpu_custom_call.1} parent=1 // pred_check_branch
      %29 = sbr.rel (0) target = $region9
    $region8: #{tpu_custom_call.1} parent=1 // pred_region
      %s31 = ssub.s32 256, 256
      %32 = vsyncadd [#allocation6], %s31
      %s33 = sshll.u32 [#allocation5], 4
      %s34 = int_to_ptr.vmem [resolvable:$true] %s33
      %39 = dma.hbm_to_vmem [thread:$0]  %s1, 256, %s34, [#allocation6], 128, 128, 8
    $region9: #{tpu_custom_call.1} parent=1 // pred_fallthru
      _
    // Predicated region
    $region10: #{tpu_custom_call.1} parent=1 // pred_check
      _
    $region11: #{tpu_custom_call.1} parent=1 // pred_check_branch
      %41 = sbr.rel (0) target = $region13
    $region12: #{tpu_custom_call.1} parent=1 // pred_region
      _
    $region13: #{tpu_custom_call.1} parent=1 // pred_fallthru
      _
    // Predicated region
    $region14: #{tpu_custom_call.1} parent=1 // pred_check
      _
    $region15: #{tpu_custom_call.1} parent=1 // pred_check_branch
      %43 = sbr.rel (0) target = $region17
    $region16: #{tpu_custom_call.1} parent=1 // pred_region
      %s45 = ssub.s32 4096, 4096
      %46 = vsyncadd [#allocation6], %s45
      %s47 = sshll.u32 [#allocation7], 4
      %s48 = int_to_ptr.vmem [resolvable:$true] %s47
      %53 = dma.hbm_to_vmem [thread:$0]  %s3, 4096, %s48, [#allocation6], 256, 256, 16
    $region17: #{tpu_custom_call.1} parent=1 // pred_fallthru
      _
    // Predicated region
    $region18: #{tpu_custom_call.1} parent=1 // pred_check
      _
    $region19: #{tpu_custom_call.1} parent=1 // pred_check_branch
      %55 = sbr.rel (0) target = $region21
    $region20: #{tpu_custom_call.1} parent=1 // pred_region
      _
    $region21: #{tpu_custom_call.1} parent=1 // pred_fallthru
      _
    // Predicated region
    $region22: #{tpu_custom_call.1} parent=1 // pred_check
      _
    $region23: #{tpu_custom_call.1} parent=1 // pred_check_branch
      %57 = sbr.rel (0) target = $region25
    $region24: #{tpu_custom_call.1} parent=1 // pred_region
      %58 = dma.done [#allocation3], 128
    $region25: #{tpu_custom_call.1} parent=1 // pred_fallthru
      _
    // Predicated region
    $region26: #{tpu_custom_call.1} parent=1 // pred_check
      _
    $region27: #{tpu_custom_call.1} parent=1 // pred_check_branch
      %60 = sbr.rel (0) target = $region29
    $region28: #{tpu_custom_call.1} parent=1 // pred_region
      %61 = dma.done [#allocation6], 256
    $region29: #{tpu_custom_call.1} parent=1 // pred_fallthru
      _
    // Predicated region
    $region30: #{tpu_custom_call.1} parent=1 // pred_check
      _
    $region31: #{tpu_custom_call.1} parent=1 // pred_check_branch
      %63 = sbr.rel (0) target = $region33
    $region32: #{tpu_custom_call.1} parent=1 // pred_region
      %64 = dma.done [#allocation6], 4096
    $region33: #{tpu_custom_call.1} parent=1 // pred_fallthru
      _
    %v65 = vld [vmem:[#allocation2] sm:$0xff]
    %v66 = vld [vmem:[#allocation5] sm:$0xff]
    %v67 = vld [vmem:[#allocation5 + $0x8] sm:$0xff]
    %v68 = vld [vmem:[%s2] sm:$0x1]
    %v70 = vlaneseq
    %v71 = vshrl.u32 %v70, 7
    %v72 = vsub.s32 0, %v71
    %v73 = vrot.slane %v68, %v72
    %vm75 = vcmask 130048
    %v77 = vsel %vm75, %v65, 0
    %79 = vmatprep.subr.mxu0 0.0
    %80 = vmatpush1.msra.mxu0 %v66
    %81 = vmatprep.subr.mxu0 0.0
    %82 = vmatpush1.msra.mxu0 %v67
    %83 = vmatprep.subr.mxu0 0.0
    %84 = vmatpush1.msra.mxu0 0.0
    %85 = vmatprep.subr.mxu0 0.0
    %86 = vmatpush1.msra.mxu0 0.0
    %87 = vmatprep.subr.mxu0 0.0
    %88 = vmatpush1.msra.mxu0 0.0
    %89 = vmatprep.subr.mxu0 0.0
    %90 = vmatpush1.msra.mxu0 0.0
    %91 = vmatprep.subr.mxu0 0.0
    %92 = vmatpush1.msra.mxu0 0.0
    %93 = vmatprep.subr.mxu0 0.0
    %94 = vmatpush1.msra.mxu0 0.0
    %95 = vmatprep.subr.mxu0 0.0
    %96 = vmatpush1.msra.mxu0 0.0
    %97 = vmatprep.subr.mxu0 0.0
    %98 = vmatpush1.msra.mxu0 0.0
    %99 = vmatprep.subr.mxu0 0.0
    %100 = vmatpush1.msra.mxu0 0.0
    %101 = vmatprep.subr.mxu0 0.0
    %102 = vmatpush1.msra.mxu0 0.0
    %103 = vmatprep.subr.mxu0 0.0
    %104 = vmatpush1.msra.mxu0 0.0
    %105 = vmatprep.subr.mxu0 0.0
    %106 = vmatpush1.msra.mxu0 0.0
    %107 = vmatprep.subr.mxu0 0.0
    %108 = vmatpush1.msra.mxu0 0.0
    %109 = vmatprep.subr.mxu0 0.0
    %110 = vmatpush1.msra.mxu0 0.0
    %111 = vmatprep.subr.mxu0 0.0
    %112 = vmatpush1.msra.mxu0 0.0
    %113 = vmatprep.subr.mxu0 0.0
    %114 = vmatpush1.msra.mxu0 0.0
    %115 = vmatprep.subr.mxu0 0.0
    %116 = vmatpush1.msra.mxu0 0.0
    %117 = vmatprep.subr.mxu0 0.0
    %118 = vmatpush1.msra.mxu0 0.0
    %119 = vmatprep.subr.mxu0 0.0
    %120 = vmatpush1.msra.mxu0 0.0
    %121 = vmatprep.subr.mxu0 0.0
    %122 = vmatpush1.msra.mxu0 0.0
    %123 = vmatprep.subr.mxu0 0.0
    %124 = vmatpush1.msra.mxu0 0.0
    %125 = vmatprep.subr.mxu0 0.0
    %126 = vmatpush1.msra.mxu0 0.0
    %127 = vmatprep.subr.mxu0 0.0
    %128 = vmatpush1.msra.mxu0 0.0
    %129 = vmatprep.subr.mxu0 0.0
    %130 = vmatpush1.msra.mxu0 0.0
    %131 = vmatprep.subr.mxu0 0.0
    %132 = vmatpush1.msra.mxu0 0.0
    %133 = vmatprep.subr.mxu0 0.0
    %134 = vmatpush1.msra.mxu0 0.0
    %135 = vmatprep.subr.mxu0 0.0
    %136 = vmatpush1.msra.mxu0 0.0
    %137 = vmatprep.subr.mxu0 0.0
    %138 = vmatpush1.msra.mxu0 0.0
    %139 = vmatprep.subr.mxu0 0.0
    %140 = vmatpush1.msra.mxu0 0.0
    %141 = vmatprep.subr.mxu0 0.0
    %142 = vmatpush1.msra.mxu0 0.0
    %143 = vmatprep.mubr.f32.mxu0 0.0
    %144 = vmatmul.mubr.f32.gmra.mrb[0].mxu0 %v77
    %v145 = vpop.f32.mrb[0].mxu0
    %v146 = vadd.f32 %v73, %v145
    %v147 = vpop.f32.mrb[0].mxu0
    %148 = vdwg.mxu0
    %v149 = vmax.f32 %v146, 0.0
    %v150 = vld [vmem:[#allocation7] sm:$0xff]
    %v151 = vld [vmem:[#allocation7 + $0x8] sm:$0xff]
    %v152 = vld [vmem:[#allocation7 + $0x10] sm:$0xff]
    %v153 = vld [vmem:[#allocation7 + $0x18] sm:$0xff]
    %v154 = vld [vmem:[#allocation7 + $0x20] sm:$0xff]
    %v155 = vld [vmem:[#allocation7 + $0x28] sm:$0xff]
    %v156 = vld [vmem:[#allocation7 + $0x30] sm:$0xff]
    %v157 = vld [vmem:[#allocation7 + $0x38] sm:$0xff]
    %v158 = vld [vmem:[#allocation7 + $0x40] sm:$0xff]
    %v159 = vld [vmem:[#allocation7 + $0x48] sm:$0xff]
    %v160 = vld [vmem:[#allocation7 + $0x50] sm:$0xff]
    %v161 = vld [vmem:[#allocation7 + $0x58] sm:$0xff]
    %v162 = vld [vmem:[#allocation7 + $0x60] sm:$0xff]
    %v163 = vld [vmem:[#allocation7 + $0x68] sm:$0xff]
    %v164 = vld [vmem:[#allocation7 + $0x70] sm:$0xff]
    %v165 = vld [vmem:[#allocation7 + $0x78] sm:$0xff]
    %v166 = vld [vmem:[#allocation7 + $0x80] sm:$0xff]
    %v167 = vld [vmem:[#allocation7 + $0x88] sm:$0xff]
    %v168 = vld [vmem:[#allocation7 + $0x90] sm:$0xff]
    %v169 = vld [vmem:[#allocation7 + $0x98] sm:$0xff]
    %v170 = vld [vmem:[#allocation7 + $0xa0] sm:$0xff]
    %v171 = vld [vmem:[#allocation7 + $0xa8] sm:$0xff]
    %v172 = vld [vmem:[#allocation7 + $0xb0] sm:$0xff]
    %v173 = vld [vmem:[#allocation7 + $0xb8] sm:$0xff]
    %v174 = vld [vmem:[#allocation7 + $0xc0] sm:$0xff]
    %v175 = vld [vmem:[#allocation7 + $0xc8] sm:$0xff]
    %v176 = vld [vmem:[#allocation7 + $0xd0] sm:$0xff]
    %v177 = vld [vmem:[#allocation7 + $0xd8] sm:$0xff]
    %v178 = vld [vmem:[#allocation7 + $0xe0] sm:$0xff]
    %v179 = vld [vmem:[#allocation7 + $0xe8] sm:$0xff]
    %v180 = vld [vmem:[#allocation7 + $0xf0] sm:$0xff]
    %v181 = vld [vmem:[#allocation7 + $0xf8] sm:$0xff]
    %v182 = vld [vmem:[%s4] sm:$0x3]
    %v184 = vlaneseq
    %v185 = vshrl.u32 %v184, 7
    %v186 = vsub.s32 0, %v185
    %v187 = vrot.slane %v182, %v186
    %v188 = vlaneseq
    %v189 = vshrl.u32 %v188, 7
    %v190 = vsub.s32 1, %v189
    %v191 = vrot.slane %v182, %v190
    %194 = vmatprep.subr.mxu0 %v151
    %195 = vmatpush1.msra.mxu0 %v150
    %196 = vmatprep.subr.mxu0 %v153
    %197 = vmatpush1.msra.mxu0 %v152
    %198 = vmatprep.subr.mxu0 %v155
    %199 = vmatpush1.msra.mxu0 %v154
    %200 = vmatprep.subr.mxu0 %v157
    %201 = vmatpush1.msra.mxu0 %v156
    %202 = vmatprep.subr.mxu0 %v159
    %203 = vmatpush1.msra.mxu0 %v158
    %204 = vmatprep.subr.mxu0 %v161
    %205 = vmatpush1.msra.mxu0 %v160
    %206 = vmatprep.subr.mxu0 %v163
    %207 = vmatpush1.msra.mxu0 %v162
    %208 = vmatprep.subr.mxu0 %v165
    %209 = vmatpush1.msra.mxu0 %v164
    %210 = vmatprep.subr.mxu0 %v167
    %211 = vmatpush1.msra.mxu0 %v166
    %212 = vmatprep.subr.mxu0 %v169
    %213 = vmatpush1.msra.mxu0 %v168
    %214 = vmatprep.subr.mxu0 %v171
    %215 = vmatpush1.msra.mxu0 %v170
    %216 = vmatprep.subr.mxu0 %v173
    %217 = vmatpush1.msra.mxu0 %v172
    %218 = vmatprep.subr.mxu0 %v175
    %219 = vmatpush1.msra.mxu0 %v174
    %220 = vmatprep.subr.mxu0 %v177
    %221 = vmatpush1.msra.mxu0 %v176
    %222 = vmatprep.subr.mxu0 %v179
    %223 = vmatpush1.msra.mxu0 %v178
    %224 = vmatprep.subr.mxu0 %v181
    %225 = vmatpush1.msra.mxu0 %v180
    %226 = vmatprep.subr.mxu0 0.0
    %227 = vmatpush1.msra.mxu0 0.0
    %228 = vmatprep.subr.mxu0 0.0
    %229 = vmatpush1.msra.mxu0 0.0
    %230 = vmatprep.subr.mxu0 0.0
    %231 = vmatpush1.msra.mxu0 0.0
    %232 = vmatprep.subr.mxu0 0.0
    %233 = vmatpush1.msra.mxu0 0.0
    %234 = vmatprep.subr.mxu0 0.0
    %235 = vmatpush1.msra.mxu0 0.0
    %236 = vmatprep.subr.mxu0 0.0
    %237 = vmatpush1.msra.mxu0 0.0
    %238 = vmatprep.subr.mxu0 0.0
    %239 = vmatpush1.msra.mxu0 0.0
    %240 = vmatprep.subr.mxu0 0.0
    %241 = vmatpush1.msra.mxu0 0.0
    %242 = vmatprep.subr.mxu0 0.0
    %243 = vmatpush1.msra.mxu0 0.0
    %244 = vmatprep.subr.mxu0 0.0
    %245 = vmatpush1.msra.mxu0 0.0
    %246 = vmatprep.subr.mxu0 0.0
    %247 = vmatpush1.msra.mxu0 0.0
    %248 = vmatprep.subr.mxu0 0.0
    %249 = vmatpush1.msra.mxu0 0.0
    %250 = vmatprep.subr.mxu0 0.0
    %251 = vmatpush1.msra.mxu0 0.0
    %252 = vmatprep.subr.mxu0 0.0
    %253 = vmatpush1.msra.mxu0 0.0
    %254 = vmatprep.subr.mxu0 0.0
    %255 = vmatpush1.msra.mxu0 0.0
    %256 = vmatprep.subr.mxu0 0.0
    %257 = vmatpush1.msra.mxu0 0.0
    %258 = vmatprep.mubr.f32.mxu0 0.0
    %259 = vmatmul.mubr.f32.gmra.mrb[0].mxu0 %v149
    %v260 = vpop.f32.mrb[0].mxu0
    %v261 = vadd.f32 %v187, %v260
    %v262 = vpop.f32.mrb[0].mxu0
    %v263 = vadd.f32 %v191, %v262
    %264 = vdwg.mxu0
    %v265 = vtanh.pop %v261
    %vm266 = vcmask 261120
    %267 = vst.msk [vmem:[#allocation8] sm:$0xff] %vm266, %v265
    %v268 = vmax.f32 %v263, -10.0
    %v269 = vmin.f32 %v268, 2.0
    %v270 = vmul.f32 %v269, 1.442695
    %v271 = vpow.pop %v270
    %272 = vst.msk [vmem:[#allocation9] sm:$0xff] %vm266, %v271
    // Predicated region
    $region34: #{tpu_custom_call.1} parent=1 // pred_check
      _
    $region35: #{tpu_custom_call.1} parent=1 // pred_check_branch
      %274 = sbr.rel (0) target = $region37
    $region36: #{tpu_custom_call.1} parent=1 // pred_region
      %s276 = ssub.s32 128, 64
      %277 = vsyncadd [#allocation4], %s276
      %s278 = sshll.u32 [#allocation8], 4
      %s279 = int_to_ptr.vmem [resolvable:$true] %s278
      %284 = dma.vmem_to_hbm [thread:$0]  %s279, 64, %s5, [#allocation4], 64, 64, 4
    $region37: #{tpu_custom_call.1} parent=1 // pred_fallthru
      _
    // Predicated region
    $region38: #{tpu_custom_call.1} parent=1 // pred_check
      _
    $region39: #{tpu_custom_call.1} parent=1 // pred_check_branch
      %286 = sbr.rel (0) target = $region41
    $region40: #{tpu_custom_call.1} parent=1 // pred_region
      %s288 = ssub.s32 128, 64
      %289 = vsyncadd [#allocation10], %s288
      %s290 = sshll.u32 [#allocation9], 4
      %s291 = int_to_ptr.vmem [resolvable:$true] %s290
      %296 = dma.vmem_to_hbm [thread:$0]  %s291, 64, %s6, [#allocation10], 64, 64, 4
    $region41: #{tpu_custom_call.1} parent=1 // pred_fallthru
      _
    // Predicated region
    $region42: #{tpu_custom_call.1} parent=1 // pred_check
      _
    $region43: #{tpu_custom_call.1} parent=1 // pred_check_branch
      %298 = sbr.rel (0) target = $region45
    $region44: #{tpu_custom_call.1} parent=1 // pred_region
      %299 = dma.done [#allocation4], 128
    $region45: #{tpu_custom_call.1} parent=1 // pred_fallthru
      _
    // Predicated region
    $region46: #{tpu_custom_call.1} parent=1 // pred_check
      _
    $region47: #{tpu_custom_call.1} parent=1 // pred_check_branch
      %301 = sbr.rel (0) target = $region49
    $region48: #{tpu_custom_call.1} parent=1 // pred_region
      %302 = dma.done [#allocation10], 128
    $region49: #{tpu_custom_call.1} parent=1 // pred_fallthru
      _
    %303 = vsyncpa [#allocation3], 1
    %304 = vsyncpa [#allocation6], 1
    %305 = vsyncpa [#allocation4], 1
    %306 = vsyncpa [#allocation10], 1

</llo_original>
